<compile_context>
chip_gen: v7x
topology: tpu7x:2x2x1
jax: 0.10.0
libtpu: 0.0.40
codegen_flags: <defaults>
</compile_context>

<pallas_src>
import functools

import jax
import jax.numpy as jnp
from jax.experimental import pallas as pl
from jax.experimental.pallas import tpu as pltpu


# ---------------------------------------------------------------------------
# Pallas kernel: one fused BiLSTM cell step (both directions, single grid step)
# ---------------------------------------------------------------------------
def _bilstm_kernel(fx_ref, bx_ref, fh_ref, bh_ref, fc_ref, bc_ref,
                   w_ih_ref, w_hh_ref, b_ref,
                   fcell_ref, fhid_ref, bcell_ref, bhid_ref):
    # fx/bx : (B, I)      inputs per direction
    # fh/bh : (B, H)      previous hidden per direction
    # fc/bc : (B, H)      previous cell per direction
    # w_ih  : (2, I, 4H)  pre-transposed, gate-reordered [i,f,o|c]
    # w_hh  : (2, H, 4H)  pre-transposed, gate-reordered [i,f,o|c]
    # b     : (2, 1, 4H)  pre-summed bias b_ih + b_hh, gate-reordered
    # outs  : 4 x (B, H)  fcell, fhidden, bcell, bhidden
    H = fc_ref.shape[-1]

    def cell_step(x, h, c, w_ih, w_hh, b):
        # Two MXU dots with f32 accumulation; gate columns pre-ordered to
        # [i, f, o | c] -> single sigmoid over the 3H slab + single tanh.
        gates = (jnp.dot(x, w_ih, preferred_element_type=jnp.float32)
                 + jnp.dot(h, w_hh, preferred_element_type=jnp.float32)
                 + b)
        sig = jax.nn.sigmoid(gates[:, :3 * H])
        cell_gate = jnp.tanh(gates[:, 3 * H:])
        i_g = sig[:, 0 * H:1 * H]
        f_g = sig[:, 1 * H:2 * H]
        o_g = sig[:, 2 * H:3 * H]
        c_new = f_g * c.astype(jnp.float32) + i_g * cell_gate
        h_new = o_g * c_new            # reference applies NO tanh to the cell
        return c_new, h_new

    fc_new, fh_new = cell_step(fx_ref[...], fh_ref[...], fc_ref[...],
                               w_ih_ref[0], w_hh_ref[0], b_ref[0])
    bc_new, bh_new = cell_step(bx_ref[...], bh_ref[...], bc_ref[...],
                               w_ih_ref[1], w_hh_ref[1], b_ref[1])

    fcell_ref[...] = fc_new.astype(fcell_ref.dtype)
    fhid_ref[...] = fh_new.astype(fhid_ref.dtype)
    bcell_ref[...] = bc_new.astype(bcell_ref.dtype)
    bhid_ref[...] = bh_new.astype(bhid_ref.dtype)


@jax.jit
def bilstm_forward(w_ih_cat, w_hh_cat, b_cat, finp, binp, fstate, bstate):
    """One BiLSTM forward step: single pallas_call, no grid, no wrapper glue."""
    fcell, fhidden = fstate
    bcell, bhidden = bstate
    B, H = fcell.shape
    dtype = finp.dtype

    vmem = functools.partial(pl.BlockSpec, memory_space=pltpu.MemorySpace.VMEM)
    out = pl.pallas_call(
        _bilstm_kernel,
        out_shape=tuple(jax.ShapeDtypeStruct((B, H), dtype) for _ in range(4)),
        in_specs=[vmem() for _ in range(9)],      # whole arrays resident in VMEM
        out_specs=tuple(vmem() for _ in range(4)),
    )(finp, binp, fhidden, bhidden, fcell, bcell, w_ih_cat, w_hh_cat, b_cat)

    fcell_n, fhidden_n, bcell_n, bhidden_n = out
    return (fcell_n, fhidden_n), (bcell_n, bhidden_n)


# ---------------------------------------------------------------------------
# Parameter construction (deterministic, mirrors nn.Linear init shapes)
# ---------------------------------------------------------------------------
def init_lstm_params(key, input_size, hidden_size, dtype=jnp.float32):
    """Shapes mirror nn.Linear(input_size, 4H) and nn.Linear(H, 4H)."""
    k = jax.random.split(key, 4)
    bound_ih = 1.0 / jnp.sqrt(jnp.array(input_size, dtype))
    bound_hh = 1.0 / jnp.sqrt(jnp.array(hidden_size, dtype))
    # PyTorch stores W as (out_features, in_features).
    w_ih = jax.random.uniform(k[0], (4 * hidden_size, input_size), dtype,
                              -bound_ih, bound_ih)
    b_ih = jax.random.uniform(k[1], (4 * hidden_size,), dtype,
                              -bound_ih, bound_ih)
    w_hh = jax.random.uniform(k[2], (4 * hidden_size, hidden_size), dtype,
                              -bound_hh, bound_hh)
    b_hh = jax.random.uniform(k[3], (4 * hidden_size,), dtype,
                              -bound_hh, bound_hh)
    return dict(w_ih=w_ih, b_ih=b_ih, w_hh=w_hh, b_hh=b_hh)


def _reorder_gate_cols(w_t, H):
    """Reorder last-dim gate columns [i, f, c, o] -> [i, f, o, c] (once, at init)."""
    return jnp.concatenate(
        [w_t[..., 0:2 * H], w_t[..., 3 * H:4 * H], w_t[..., 2 * H:3 * H]],
        axis=-1)


def _fuse_params(p, H):
    """Pre-transpose weights, pre-sum biases (f32), reorder gate columns."""
    w_ih_t = _reorder_gate_cols(p["w_ih"].T, H)                      # (I, 4H)
    w_hh_t = _reorder_gate_cols(p["w_hh"].T, H)                      # (H, 4H)
    b = _reorder_gate_cols(
        (p["b_ih"].astype(jnp.float32) + p["b_hh"].astype(jnp.float32)), H)
    return w_ih_t, w_hh_t, b[None, :]                                # (1, 4H)


# ---------------------------------------------------------------------------
# BiLSTM
# ---------------------------------------------------------------------------
class BiLSTM:
    def __init__(self, input_size, hidden_size, key, dtype=jnp.float32):
        self.input_size = input_size
        self.hidden_size = hidden_size
        kf, kb = jax.random.split(key)
        self.fwd_params = init_lstm_params(kf, input_size, hidden_size, dtype)
        self.bwd_params = init_lstm_params(kb, input_size, hidden_size, dtype)
        # Fused, direction-stacked weight layout, built ONCE at init.
        wif, whf, bf = _fuse_params(self.fwd_params, hidden_size)
        wib, whb, bb = _fuse_params(self.bwd_params, hidden_size)
        self.w_ih_cat = jnp.stack([wif, wib], axis=0)   # (2, I, 4H)
        self.w_hh_cat = jnp.stack([whf, whb], axis=0)   # (2, H, 4H)
        self.b_cat = jnp.stack([bf, bb], axis=0)        # (2, 1, 4H)

    def init_hidden(self, bs, dtype=jnp.float32):
        z = jnp.zeros((bs, self.hidden_size), dtype)
        return ((z, z), (z, z))

    def forward(self, finp, binp, fstate, bstate):
        (fc, fh), (bc, bh) = bilstm_forward(
            self.w_ih_cat, self.w_hh_cat, self.b_cat,
            finp, binp, fstate, bstate)
        return ([fc, fh], [bc, bh])


# ---------------------------------------------------------------------------
# Pure-JAX reference for correctness check (original gate order, no fusion)
# ---------------------------------------------------------------------------
def lstm_forward_ref(params, inp, state):
    cell, hidden = state
    gates = (inp @ params["w_ih"].T + params["b_ih"]
             + hidden @ params["w_hh"].T + params["b_hh"])
    H = cell.shape[-1]
    i, f, c, o = (gates[:, 0:H], gates[:, H:2 * H],
                  gates[:, 2 * H:3 * H], gates[:, 3 * H:4 * H])
    cell_new = jax.nn.sigmoid(f) * cell + jax.nn.sigmoid(i) * jnp.tanh(c)
    hidden_new = jax.nn.sigmoid(o) * cell_new
    return (cell_new, hidden_new)


if __name__ == "__main__":
    INPUT_SIZE = 16
    HIDDEN_SIZE = 32
    BATCH = 2

    key = jax.random.PRNGKey(0)
    k_model, k_finp, k_binp = jax.random.split(key, 3)

    model = BiLSTM(INPUT_SIZE, HIDDEN_SIZE, k_model)

    finp = jax.random.normal(k_finp, (BATCH, INPUT_SIZE), jnp.float32)
    binp = jax.random.normal(k_binp, (BATCH, INPUT_SIZE), jnp.float32)
    fstate, bstate = model.init_hidden(BATCH)

    fout, bout = model.forward(finp, binp, fstate, bstate)
    jax.block_until_ready(fout)
    jax.block_until_ready(bout)

    # correctness vs. pure-JAX reference
    fref = lstm_forward_ref(model.fwd_params, finp, fstate)
    bref = lstm_forward_ref(model.bwd_params, binp, bstate)
    for got, want in zip(list(fout) + list(bout), list(fref) + list(bref)):
        assert jnp.allclose(got, want, atol=1e-5, rtol=1e-5), \
            f"mismatch: max abs err {jnp.max(jnp.abs(got - want))}"

    print("KERNEL_OK")
</pallas_src>

<mosaic_0001>
module attributes {stable_mosaic.version = 11 : i64} {
  func.func @_bilstm_kernel(%arg0: memref<2x16xf32, #tpu.memory_space<vmem>>, %arg1: memref<2x16xf32, #tpu.memory_space<vmem>>, %arg2: memref<2x32xf32, #tpu.memory_space<vmem>>, %arg3: memref<2x32xf32, #tpu.memory_space<vmem>>, %arg4: memref<2x32xf32, #tpu.memory_space<vmem>>, %arg5: memref<2x32xf32, #tpu.memory_space<vmem>>, %arg6: memref<2x16x128xf32, #tpu.memory_space<vmem>>, %arg7: memref<2x32x128xf32, #tpu.memory_space<vmem>>, %arg8: memref<2x1x128xf32, #tpu.memory_space<vmem>>, %arg9: memref<2x32xf32, #tpu.memory_space<vmem>>, %arg10: memref<2x32xf32, #tpu.memory_space<vmem>>, %arg11: memref<2x32xf32, #tpu.memory_space<vmem>>, %arg12: memref<2x32xf32, #tpu.memory_space<vmem>>) attributes {dimension_semantics = [], scalar_prefetch = 0 : i64, scratch_operands = 0 : i64, tpu.core_type = #tpu.core_type<tc>} {
    %c0 = arith.constant 0 : index
    %c0_0 = arith.constant 0 : index
    %0 = vector.load %arg0[%c0, %c0_0] : memref<2x16xf32, #tpu.memory_space<vmem>>, vector<2x16xf32>
    %c0_1 = arith.constant 0 : index
    %c0_2 = arith.constant 0 : index
    %1 = vector.load %arg2[%c0_1, %c0_2] : memref<2x32xf32, #tpu.memory_space<vmem>>, vector<2x32xf32>
    %c0_3 = arith.constant 0 : index
    %c0_4 = arith.constant 0 : index
    %2 = vector.load %arg4[%c0_3, %c0_4] : memref<2x32xf32, #tpu.memory_space<vmem>>, vector<2x32xf32>
    %c0_5 = arith.constant 0 : index
    %c0_6 = arith.constant 0 : index
    %c0_7 = arith.constant 0 : index
    %3 = vector.load %arg6[%c0_5, %c0_6, %c0_7] : memref<2x16x128xf32, #tpu.memory_space<vmem>>, vector<1x16x128xf32>
    %4 = vector.shape_cast %3 : vector<1x16x128xf32> to vector<16x128xf32>
    %c0_8 = arith.constant 0 : index
    %c0_9 = arith.constant 0 : index
    %c0_10 = arith.constant 0 : index
    %5 = vector.load %arg7[%c0_8, %c0_9, %c0_10] : memref<2x32x128xf32, #tpu.memory_space<vmem>>, vector<1x32x128xf32>
    %6 = vector.shape_cast %5 : vector<1x32x128xf32> to vector<32x128xf32>
    %c0_11 = arith.constant 0 : index
    %c0_12 = arith.constant 0 : index
    %c0_13 = arith.constant 0 : index
    %7 = vector.load %arg8[%c0_11, %c0_12, %c0_13] : memref<2x1x128xf32, #tpu.memory_space<vmem>>, vector<1x1x128xf32>
    %8 = vector.shape_cast %7 : vector<1x1x128xf32> to vector<1x128xf32>
    %cst = arith.constant dense<0.000000e+00> : vector<2x128xf32>
    %9 = tpu.matmul %0, %4, %cst {dimension_numbers = #tpu.dot_dimension_numbers<[1], [0], [0], [1], [0, 0, 1, 1], [], []>} : vector<2x16xf32>, vector<16x128xf32>, vector<2x128xf32> -> vector<2x128xf32>
    %cst_14 = arith.constant dense<0.000000e+00> : vector<2x128xf32>
    %10 = tpu.matmul %1, %6, %cst_14 {dimension_numbers = #tpu.dot_dimension_numbers<[1], [0], [0], [1], [0, 0, 1, 1], [], []>} : vector<2x32xf32>, vector<32x128xf32>, vector<2x128xf32> -> vector<2x128xf32>
    %11 = arith.addf %9, %10 : vector<2x128xf32>
    %12 = vector.broadcast %8 : vector<1x128xf32> to vector<2x128xf32>
    %13 = arith.addf %11, %12 : vector<2x128xf32>
    %14 = vector.extract_strided_slice %13 {offsets = [0, 0], sizes = [2, 96], strides = [1, 1]} : vector<2x128xf32> to vector<2x96xf32>
    %15 = arith.negf %14 : vector<2x96xf32>
    %16 = math.exp %15 : vector<2x96xf32>
    %cst_15 = arith.constant 1.000000e+00 : f32
    %17 = vector.broadcast %cst_15 : f32 to vector<2x96xf32>
    %18 = arith.addf %17, %16 : vector<2x96xf32>
    %19 = arith.divf %17, %18 : vector<2x96xf32>
    %20 = vector.extract_strided_slice %13 {offsets = [0, 96], sizes = [2, 32], strides = [1, 1]} : vector<2x128xf32> to vector<2x32xf32>
    %21 = math.tanh %20 : vector<2x32xf32>
    %22 = vector.extract_strided_slice %19 {offsets = [0, 0], sizes = [2, 32], strides = [1, 1]} : vector<2x96xf32> to vector<2x32xf32>
    %23 = vector.extract_strided_slice %19 {offsets = [0, 32], sizes = [2, 32], strides = [1, 1]} : vector<2x96xf32> to vector<2x32xf32>
    %24 = vector.extract_strided_slice %19 {offsets = [0, 64], sizes = [2, 32], strides = [1, 1]} : vector<2x96xf32> to vector<2x32xf32>
    %25 = arith.mulf %23, %2 : vector<2x32xf32>
    %26 = arith.mulf %22, %21 : vector<2x32xf32>
    %27 = arith.addf %25, %26 : vector<2x32xf32>
    %28 = arith.mulf %24, %27 : vector<2x32xf32>
    %c0_16 = arith.constant 0 : index
    %c0_17 = arith.constant 0 : index
    %29 = vector.load %arg1[%c0_16, %c0_17] : memref<2x16xf32, #tpu.memory_space<vmem>>, vector<2x16xf32>
    %c0_18 = arith.constant 0 : index
    %c0_19 = arith.constant 0 : index
    %30 = vector.load %arg3[%c0_18, %c0_19] : memref<2x32xf32, #tpu.memory_space<vmem>>, vector<2x32xf32>
    %c0_20 = arith.constant 0 : index
    %c0_21 = arith.constant 0 : index
    %31 = vector.load %arg5[%c0_20, %c0_21] : memref<2x32xf32, #tpu.memory_space<vmem>>, vector<2x32xf32>
    %c1 = arith.constant 1 : index
    %c0_22 = arith.constant 0 : index
    %c0_23 = arith.constant 0 : index
    %32 = vector.load %arg6[%c1, %c0_22, %c0_23] : memref<2x16x128xf32, #tpu.memory_space<vmem>>, vector<1x16x128xf32>
    %33 = vector.shape_cast %32 : vector<1x16x128xf32> to vector<16x128xf32>
    %c1_24 = arith.constant 1 : index
    %c0_25 = arith.constant 0 : index
    %c0_26 = arith.constant 0 : index
    %34 = vector.load %arg7[%c1_24, %c0_25, %c0_26] : memref<2x32x128xf32, #tpu.memory_space<vmem>>, vector<1x32x128xf32>
    %35 = vector.shape_cast %34 : vector<1x32x128xf32> to vector<32x128xf32>
    %c1_27 = arith.constant 1 : index
    %c0_28 = arith.constant 0 : index
    %c0_29 = arith.constant 0 : index
    %36 = vector.load %arg8[%c1_27, %c0_28, %c0_29] : memref<2x1x128xf32, #tpu.memory_space<vmem>>, vector<1x1x128xf32>
    %37 = vector.shape_cast %36 : vector<1x1x128xf32> to vector<1x128xf32>
    %cst_30 = arith.constant dense<0.000000e+00> : vector<2x128xf32>
    %38 = tpu.matmul %29, %33, %cst_30 {dimension_numbers = #tpu.dot_dimension_numbers<[1], [0], [0], [1], [0, 0, 1, 1], [], []>} : vector<2x16xf32>, vector<16x128xf32>, vector<2x128xf32> -> vector<2x128xf32>
    %cst_31 = arith.constant dense<0.000000e+00> : vector<2x128xf32>
    %39 = tpu.matmul %30, %35, %cst_31 {dimension_numbers = #tpu.dot_dimension_numbers<[1], [0], [0], [1], [0, 0, 1, 1], [], []>} : vector<2x32xf32>, vector<32x128xf32>, vector<2x128xf32> -> vector<2x128xf32>
    %40 = arith.addf %38, %39 : vector<2x128xf32>
    %41 = vector.broadcast %37 : vector<1x128xf32> to vector<2x128xf32>
    %42 = arith.addf %40, %41 : vector<2x128xf32>
    %43 = vector.extract_strided_slice %42 {offsets = [0, 0], sizes = [2, 96], strides = [1, 1]} : vector<2x128xf32> to vector<2x96xf32>
    %44 = arith.negf %43 : vector<2x96xf32>
    %45 = math.exp %44 : vector<2x96xf32>
    %cst_32 = arith.constant 1.000000e+00 : f32
    %46 = vector.broadcast %cst_32 : f32 to vector<2x96xf32>
    %47 = arith.addf %46, %45 : vector<2x96xf32>
    %48 = arith.divf %46, %47 : vector<2x96xf32>
    %49 = vector.extract_strided_slice %42 {offsets = [0, 96], sizes = [2, 32], strides = [1, 1]} : vector<2x128xf32> to vector<2x32xf32>
    %50 = math.tanh %49 : vector<2x32xf32>
    %51 = vector.extract_strided_slice %48 {offsets = [0, 0], sizes = [2, 32], strides = [1, 1]} : vector<2x96xf32> to vector<2x32xf32>
    %52 = vector.extract_strided_slice %48 {offsets = [0, 32], sizes = [2, 32], strides = [1, 1]} : vector<2x96xf32> to vector<2x32xf32>
    %53 = vector.extract_strided_slice %48 {offsets = [0, 64], sizes = [2, 32], strides = [1, 1]} : vector<2x96xf32> to vector<2x32xf32>
    %54 = arith.mulf %52, %31 : vector<2x32xf32>
    %55 = arith.mulf %51, %50 : vector<2x32xf32>
    %56 = arith.addf %54, %55 : vector<2x32xf32>
    %57 = arith.mulf %53, %56 : vector<2x32xf32>
    %c0_33 = arith.constant 0 : index
    %c0_34 = arith.constant 0 : index
    %58 = vector.load %arg9[%c0_33, %c0_34] : memref<2x32xf32, #tpu.memory_space<vmem>>, vector<2x32xf32>
    tpu.vector_store %arg9[%c0_33, %c0_34], %27 {strides = array<i32>} : memref<2x32xf32, #tpu.memory_space<vmem>>, vector<2x32xf32>,
    %c0_35 = arith.constant 0 : index
    %c0_36 = arith.constant 0 : index
    %59 = vector.load %arg10[%c0_35, %c0_36] : memref<2x32xf32, #tpu.memory_space<vmem>>, vector<2x32xf32>
    tpu.vector_store %arg10[%c0_35, %c0_36], %28 {strides = array<i32>} : memref<2x32xf32, #tpu.memory_space<vmem>>, vector<2x32xf32>,
    %c0_37 = arith.constant 0 : index
    %c0_38 = arith.constant 0 : index
    %60 = vector.load %arg11[%c0_37, %c0_38] : memref<2x32xf32, #tpu.memory_space<vmem>>, vector<2x32xf32>
    tpu.vector_store %arg11[%c0_37, %c0_38], %56 {strides = array<i32>} : memref<2x32xf32, #tpu.memory_space<vmem>>, vector<2x32xf32>,
    %c0_39 = arith.constant 0 : index
    %c0_40 = arith.constant 0 : index
    %61 = vector.load %arg12[%c0_39, %c0_40] : memref<2x32xf32, #tpu.memory_space<vmem>>, vector<2x32xf32>
    tpu.vector_store %arg12[%c0_39, %c0_40], %57 {strides = array<i32>} : memref<2x32xf32, #tpu.memory_space<vmem>>, vector<2x32xf32>,
    return
  }
}

</mosaic_0001>

<llo_original>
// kernel: bilstm_forward.1
$region0: #{bilstm_forward.1}
  #allocation0 [shape = 'u32[]', space=smem, size = 0x4, offset = 0x4, fixed_abs, tag = 'smem constant byte address 0x4 - core index']
  #allocation1 [shape = 'u32[144,128]{1,0:T(1,128)}', space=vmem, size = 0x12000, scoped, tag = 'internal scratch']
  %s0 = inlined_call_operand.vmem [shape: f32[2,16], index: 0, kind: input, shape index: {}]
  %s1 = inlined_call_operand.vmem [shape: f32[2,16], index: 1, kind: input, shape index: {}]
  %s2 = inlined_call_operand.vmem [shape: f32[2,32], index: 2, kind: input, shape index: {}]
  %s3 = inlined_call_operand.vmem [shape: f32[2,32], index: 3, kind: input, shape index: {}]
  %s4 = inlined_call_operand.vmem [shape: f32[2,32], index: 4, kind: input, shape index: {}]
  %s5 = inlined_call_operand.vmem [shape: f32[2,32], index: 5, kind: input, shape index: {}]
  %s6 = inlined_call_operand.hbm [shape: f32[2,16,128], index: 6, kind: input, shape index: {}]
  %s7 = inlined_call_operand.hbm [shape: f32[2,32,128], index: 7, kind: input, shape index: {}]
  %s8 = inlined_call_operand.hbm [shape: f32[2,1,128], index: 8, kind: input, shape index: {}]
  %s9 = inlined_call_operand.hbm [shape: f32[2,32], index: 9, kind: output, shape index: {0}]
  %s10 = inlined_call_operand.hbm [shape: f32[2,32], index: 10, kind: output, shape index: {1}]
  %s11 = inlined_call_operand.hbm [shape: f32[2,32], index: 11, kind: output, shape index: {2}]
  %s12 = inlined_call_operand.hbm [shape: f32[2,32], index: 12, kind: output, shape index: {3}]
  %13 = xla_tuple %s9, %s10, %s11, %s12
  %s14 = sld [smem:[#allocation0]]
  $region82: #{bilstm_forward.1} parent=0
    _
  %s16 = ssub.s32 1, %s14
  %s17 = scalar_select 0, %s16, %s14
  $region1: #{bilstm_forward.1} parent=0
    #allocation2 [shape = 'u8[16384]{0}', space=vmem, size = 0x4000, scoped, tag = 'input window, operand 6, single buffered']
    #allocation3 [shape = 's32[1]{0}', space=sflag, size = 0x4, scoped, tag = 'scoped memory for bilstm_forward.1']
    #allocation4 [shape = 's32[1]{0}', space=sflag, size = 0x4, scoped, tag = 'scoped memory for bilstm_forward.1']
    #allocation5 [shape = 'u8[32768]{0}', space=vmem, size = 0x8000, scoped, tag = 'input window, operand 7, single buffered']
    #allocation6 [shape = 's32[1]{0}', space=sflag, size = 0x4, scoped, tag = 'scoped memory for bilstm_forward.1']
    #allocation7 [shape = 'u8[1024]{0}', space=vmem, size = 0x400, scoped, tag = 'input window, operand 8, single buffered']
    #allocation8 [shape = 'u8[1024]{0}', space=vmem, size = 0x400, scoped, tag = 'output window, operand 0, single buffered']
    #allocation9 [shape = 'u8[1024]{0}', space=vmem, size = 0x400, scoped, tag = 'output window, operand 1, single buffered']
    #allocation10 [shape = 's32[1]{0}', space=sflag, size = 0x4, scoped, tag = 'scoped memory for bilstm_forward.1']
    #allocation11 [shape = 'u8[1024]{0}', space=vmem, size = 0x400, scoped, tag = 'output window, operand 2, single buffered']
    #allocation12 [shape = 'u8[1024]{0}', space=vmem, size = 0x400, scoped, tag = 'output window, operand 3, single buffered']
    #allocation13 [shape = 's32[1]{0}', space=sflag, size = 0x4, scoped, tag = 'scoped memory for bilstm_forward.1']
    %18 = vsyncpa [#allocation3], 0
    %19 = vsyncpa [#allocation6], 0
    %20 = vsyncpa [#allocation4], 0
    %21 = vsyncpa [#allocation10], 0
    %22 = vsyncpa [#allocation13], 0
    // Predicated region
    $region2: #{bilstm_forward.1} parent=1 // pred_check
      _
    $region3: #{bilstm_forward.1} parent=1 // pred_check_branch
      %24 = sbr.rel (0) target = $region5
    $region4: #{bilstm_forward.1} parent=1 // pred_region
      _
    $region5: #{bilstm_forward.1} parent=1 // pred_fallthru
      _
    // Predicated region
    $region6: #{bilstm_forward.1} parent=1 // pred_check
      _
    $region7: #{bilstm_forward.1} parent=1 // pred_check_branch
      %26 = sbr.rel (0) target = $region9
    $region8: #{bilstm_forward.1} parent=1 // pred_region
      _
    $region9: #{bilstm_forward.1} parent=1 // pred_fallthru
      _
    // Predicated region
    $region10: #{bilstm_forward.1} parent=1 // pred_check
      _
    $region11: #{bilstm_forward.1} parent=1 // pred_check_branch
      %28 = sbr.rel (0) target = $region13
    $region12: #{bilstm_forward.1} parent=1 // pred_region
      _
    $region13: #{bilstm_forward.1} parent=1 // pred_fallthru
      _
    // Predicated region
    $region14: #{bilstm_forward.1} parent=1 // pred_check
      _
    $region15: #{bilstm_forward.1} parent=1 // pred_check_branch
      %30 = sbr.rel (0) target = $region17
    $region16: #{bilstm_forward.1} parent=1 // pred_region
      _
    $region17: #{bilstm_forward.1} parent=1 // pred_fallthru
      _
    // Predicated region
    $region18: #{bilstm_forward.1} parent=1 // pred_check
      _
    $region19: #{bilstm_forward.1} parent=1 // pred_check_branch
      %32 = sbr.rel (0) target = $region21
    $region20: #{bilstm_forward.1} parent=1 // pred_region
      _
    $region21: #{bilstm_forward.1} parent=1 // pred_fallthru
      _
    // Predicated region
    $region22: #{bilstm_forward.1} parent=1 // pred_check
      _
    $region23: #{bilstm_forward.1} parent=1 // pred_check_branch
      %34 = sbr.rel (0) target = $region25
    $region24: #{bilstm_forward.1} parent=1 // pred_region
      _
    $region25: #{bilstm_forward.1} parent=1 // pred_fallthru
      _
    // Predicated region
    $region26: #{bilstm_forward.1} parent=1 // pred_check
      _
    $region27: #{bilstm_forward.1} parent=1 // pred_check_branch
      %36 = sbr.rel (0) target = $region29
    $region28: #{bilstm_forward.1} parent=1 // pred_region
      %s38 = ssub.s32 512, 512
      %39 = vsyncadd [#allocation3], %s38
      %s40 = sshll.u32 [#allocation2], 4
      %s41 = int_to_ptr.vmem [resolvable:$true] %s40
      %46 = dma.hbm_to_vmem [thread:$0]  %s6, 512, %s41, [#allocation3], 128, 128, 8
    $region29: #{bilstm_forward.1} parent=1 // pred_fallthru
      _
    // Predicated region
    $region30: #{bilstm_forward.1} parent=1 // pred_check
      _
    $region31: #{bilstm_forward.1} parent=1 // pred_check_branch
      %48 = sbr.rel (0) target = $region33
    $region32: #{bilstm_forward.1} parent=1 // pred_region
      %s50 = ssub.s32 1024, 1024
      %51 = vsyncadd [#allocation6], %s50
      %s52 = sshll.u32 [#allocation5], 4
      %s53 = int_to_ptr.vmem [resolvable:$true] %s52
      %58 = dma.hbm_to_vmem [thread:$0]  %s7, 1024, %s53, [#allocation6], 128, 128, 8
    $region33: #{bilstm_forward.1} parent=1 // pred_fallthru
      _
    // Predicated region
    $region34: #{bilstm_forward.1} parent=1 // pred_check
      _
    $region35: #{bilstm_forward.1} parent=1 // pred_check_branch
      %60 = sbr.rel (0) target = $region37
    $region36: #{bilstm_forward.1} parent=1 // pred_region
      %s62 = ssub.s32 32, 32
      %63 = vsyncadd [#allocation6], %s62
      %s64 = sshll.u32 [#allocation7], 4
      %s65 = int_to_ptr.vmem [resolvable:$true] %s64
      %70 = dma.hbm_to_vmem [thread:$0]  %s8, 32, %s65, [#allocation6], 16, 16, 1
    $region37: #{bilstm_forward.1} parent=1 // pred_fallthru
      _
    // Predicated region
    $region38: #{bilstm_forward.1} parent=1 // pred_check
      _
    $region39: #{bilstm_forward.1} parent=1 // pred_check_branch
      %72 = sbr.rel (0) target = $region41
    $region40: #{bilstm_forward.1} parent=1 // pred_region
      %73 = dma.done [#allocation3], 512
    $region41: #{bilstm_forward.1} parent=1 // pred_fallthru
      _
    // Predicated region
    $region42: #{bilstm_forward.1} parent=1 // pred_check
      _
    $region43: #{bilstm_forward.1} parent=1 // pred_check_branch
      %75 = sbr.rel (0) target = $region45
    $region44: #{bilstm_forward.1} parent=1 // pred_region
      %76 = dma.done [#allocation6], 1024
    $region45: #{bilstm_forward.1} parent=1 // pred_fallthru
      _
    // Predicated region
    $region46: #{bilstm_forward.1} parent=1 // pred_check
      _
    $region47: #{bilstm_forward.1} parent=1 // pred_check_branch
      %78 = sbr.rel (0) target = $region49
    $region48: #{bilstm_forward.1} parent=1 // pred_region
      %79 = dma.done [#allocation6], 32
    $region49: #{bilstm_forward.1} parent=1 // pred_fallthru
      _
    %v80 = vld [vmem:[%s0] sm:$0x3]
    %v81 = vld [vmem:[%s2] sm:$0x3]
    %v82 = vld [vmem:[%s4] sm:$0x3]
    %v83 = vld [vmem:[#allocation2] sm:$0xff]
    %v84 = vld [vmem:[#allocation2 + $0x8] sm:$0xff]
    %v85 = vld [vmem:[#allocation5] sm:$0xff]
    %v86 = vld [vmem:[#allocation5 + $0x8] sm:$0xff]
    %v87 = vld [vmem:[#allocation5 + $0x10] sm:$0xff]
    %v88 = vld [vmem:[#allocation5 + $0x18] sm:$0xff]
    %v89 = vld [vmem:[#allocation7] sm:$0x1]
    %vm90 = vcmask 261120
    %v92 = vsel %vm90, %v81, 0
    %94 = vmatprep.subr.mxu0 0.0
    %95 = vmatpush1.msra.mxu0 %v85
    %96 = vmatprep.subr.mxu0 0.0
    %97 = vmatpush1.msra.mxu0 %v86
    %98 = vmatprep.subr.mxu0 0.0
    %99 = vmatpush1.msra.mxu0 %v87
    %100 = vmatprep.subr.mxu0 0.0
    %101 = vmatpush1.msra.mxu0 %v88
    %102 = vmatprep.subr.mxu0 0.0
    %103 = vmatpush1.msra.mxu0 0.0
    %104 = vmatprep.subr.mxu0 0.0
    %105 = vmatpush1.msra.mxu0 0.0
    %106 = vmatprep.subr.mxu0 0.0
    %107 = vmatpush1.msra.mxu0 0.0
    %108 = vmatprep.subr.mxu0 0.0
    %109 = vmatpush1.msra.mxu0 0.0
    %110 = vmatprep.subr.mxu0 0.0
    %111 = vmatpush1.msra.mxu0 0.0
    %112 = vmatprep.subr.mxu0 0.0
    %113 = vmatpush1.msra.mxu0 0.0
    %114 = vmatprep.subr.mxu0 0.0
    %115 = vmatpush1.msra.mxu0 0.0
    %116 = vmatprep.subr.mxu0 0.0
    %117 = vmatpush1.msra.mxu0 0.0
    %118 = vmatprep.subr.mxu0 0.0
    %119 = vmatpush1.msra.mxu0 0.0
    %120 = vmatprep.subr.mxu0 0.0
    %121 = vmatpush1.msra.mxu0 0.0
    %122 = vmatprep.subr.mxu0 0.0
    %123 = vmatpush1.msra.mxu0 0.0
    %124 = vmatprep.subr.mxu0 0.0
    %125 = vmatpush1.msra.mxu0 0.0
    %126 = vmatprep.subr.mxu0 0.0
    %127 = vmatpush1.msra.mxu0 0.0
    %128 = vmatprep.subr.mxu0 0.0
    %129 = vmatpush1.msra.mxu0 0.0
    %130 = vmatprep.subr.mxu0 0.0
    %131 = vmatpush1.msra.mxu0 0.0
    %132 = vmatprep.subr.mxu0 0.0
    %133 = vmatpush1.msra.mxu0 0.0
    %134 = vmatprep.subr.mxu0 0.0
    %135 = vmatpush1.msra.mxu0 0.0
    %136 = vmatprep.subr.mxu0 0.0
    %137 = vmatpush1.msra.mxu0 0.0
    %138 = vmatprep.subr.mxu0 0.0
    %139 = vmatpush1.msra.mxu0 0.0
    %140 = vmatprep.subr.mxu0 0.0
    %141 = vmatpush1.msra.mxu0 0.0
    %142 = vmatprep.subr.mxu0 0.0
    %143 = vmatpush1.msra.mxu0 0.0
    %144 = vmatprep.subr.mxu0 0.0
    %145 = vmatpush1.msra.mxu0 0.0
    %146 = vmatprep.subr.mxu0 0.0
    %147 = vmatpush1.msra.mxu0 0.0
    %148 = vmatprep.subr.mxu0 0.0
    %149 = vmatpush1.msra.mxu0 0.0
    %150 = vmatprep.subr.mxu0 0.0
    %151 = vmatpush1.msra.mxu0 0.0
    %152 = vmatprep.subr.mxu0 0.0
    %153 = vmatpush1.msra.mxu0 0.0
    %154 = vmatprep.subr.mxu0 0.0
    %155 = vmatpush1.msra.mxu0 0.0
    %156 = vmatprep.subr.mxu0 0.0
    %157 = vmatpush1.msra.mxu0 0.0
    %158 = vmatprep.mubr.f32.mxu0 0.0
    %159 = vmatmul.mubr.f32.gmra.mrb[0].mxu0 %v92
    %v160 = vpop.f32.mrb[0].mxu0
    %v161 = vadd.f32 0.0, %v160
    %v162 = vpop.f32.mrb[0].mxu0
    %163 = vdwg.mxu0
    %vm164 = vcmask 130048
    %v166 = vsel %vm164, %v80, 0
    %168 = vmatprep.subr.mxu0 0.0
    %169 = vmatpush1.msra.mxu0 %v83
    %170 = vmatprep.subr.mxu0 0.0
    %171 = vmatpush1.msra.mxu0 %v84
    %172 = vmatprep.subr.mxu0 0.0
    %173 = vmatpush1.msra.mxu0 0.0
    %174 = vmatprep.subr.mxu0 0.0
    %175 = vmatpush1.msra.mxu0 0.0
    %176 = vmatprep.subr.mxu0 0.0
    %177 = vmatpush1.msra.mxu0 0.0
    %178 = vmatprep.subr.mxu0 0.0
    %179 = vmatpush1.msra.mxu0 0.0
    %180 = vmatprep.subr.mxu0 0.0
    %181 = vmatpush1.msra.mxu0 0.0
    %182 = vmatprep.subr.mxu0 0.0
    %183 = vmatpush1.msra.mxu0 0.0
    %184 = vmatprep.subr.mxu0 0.0
    %185 = vmatpush1.msra.mxu0 0.0
    %186 = vmatprep.subr.mxu0 0.0
    %187 = vmatpush1.msra.mxu0 0.0
    %188 = vmatprep.subr.mxu0 0.0
    %189 = vmatpush1.msra.mxu0 0.0
    %190 = vmatprep.subr.mxu0 0.0
    %191 = vmatpush1.msra.mxu0 0.0
    %192 = vmatprep.subr.mxu0 0.0
    %193 = vmatpush1.msra.mxu0 0.0
    %194 = vmatprep.subr.mxu0 0.0
    %195 = vmatpush1.msra.mxu0 0.0
    %196 = vmatprep.subr.mxu0 0.0
    %197 = vmatpush1.msra.mxu0 0.0
    %198 = vmatprep.subr.mxu0 0.0
    %199 = vmatpush1.msra.mxu0 0.0
    %200 = vmatprep.subr.mxu0 0.0
    %201 = vmatpush1.msra.mxu0 0.0
    %202 = vmatprep.subr.mxu0 0.0
    %203 = vmatpush1.msra.mxu0 0.0
    %204 = vmatprep.subr.mxu0 0.0
    %205 = vmatpush1.msra.mxu0 0.0
    %206 = vmatprep.subr.mxu0 0.0
    %207 = vmatpush1.msra.mxu0 0.0
    %208 = vmatprep.subr.mxu0 0.0
    %209 = vmatpush1.msra.mxu0 0.0
    %210 = vmatprep.subr.mxu0 0.0
    %211 = vmatpush1.msra.mxu0 0.0
    %212 = vmatprep.subr.mxu0 0.0
    %213 = vmatpush1.msra.mxu0 0.0
    %214 = vmatprep.subr.mxu0 0.0
    %215 = vmatpush1.msra.mxu0 0.0
    %216 = vmatprep.subr.mxu0 0.0
    %217 = vmatpush1.msra.mxu0 0.0
    %218 = vmatprep.subr.mxu0 0.0
    %219 = vmatpush1.msra.mxu0 0.0
    %220 = vmatprep.subr.mxu0 0.0
    %221 = vmatpush1.msra.mxu0 0.0
    %222 = vmatprep.subr.mxu0 0.0
    %223 = vmatpush1.msra.mxu0 0.0
    %224 = vmatprep.subr.mxu0 0.0
    %225 = vmatpush1.msra.mxu0 0.0
    %226 = vmatprep.subr.mxu0 0.0
    %227 = vmatpush1.msra.mxu0 0.0
    %228 = vmatprep.subr.mxu0 0.0
    %229 = vmatpush1.msra.mxu0 0.0
    %230 = vmatprep.subr.mxu0 0.0
    %231 = vmatpush1.msra.mxu0 0.0
    %232 = vmatprep.mubr.f32.mxu0 0.0
    %233 = vmatmul.mubr.f32.gmra.mrb[0].mxu0 %v166
    %v234 = vpop.f32.mrb[0].mxu0
    %v235 = vadd.f32 %v161, %v234
    %v236 = vpop.f32.mrb[0].mxu0
    %237 = vdwg.mxu0
    %v239 = vlaneseq
    %v240 = vshrl.u32 %v239, 7
    %v241 = vsub.s32 0, %v240
    %v242 = vrot.slane %v89, %v241
    %v244 = vadd.f32 %v235, %v242
    %v245 = vxor.u32 %v244, 2147483648
    %v246 = vmul.f32 %v245, 1.442695
    %v247 = vpow.pop %v246
    %v248 = vadd.f32 %v247, 1.0
    %v249 = vrcp.pop %v248
    %v250 = vmul.f32 1.0, %v249
    %v251 = vtanh.pop %v244
    %253 = vrot.lane.b32.xlu0 %v82, 32
    %v254 = vpop.permute.xlu0 %253
    %v256 = vmul.f32 %v250, %v254
    %258 = vrot.lane.b32.xlu0 %v251, 32
    %v259 = vpop.permute.xlu0 %258
    %v261 = vmul.f32 %v250, %v259
    %263 = vrot.lane.b32.xlu0 %v261, 32
    %v264 = vpop.permute.xlu0 %263
    %v266 = vadd.f32 %v256, %v264
    %268 = vrot.lane.b32.xlu0 %v266, 32
    %v269 = vpop.permute.xlu0 %268
    %v271 = vmul.f32 %v250, %v269
    %v272 = vld [vmem:[%s1] sm:$0x3]
    %v273 = vld [vmem:[%s3] sm:$0x3]
    %v274 = vld [vmem:[%s5] sm:$0x3]
    %s275 = scalar_lea.vmem [#allocation2], 16
    %v276 = vld [vmem:[%s275] sm:$0xff]
    %v277 = vld [vmem:[%s275 + $0x8] sm:$0xff]
    %s278 = scalar_lea.vmem [#allocation5], 32
    %v279 = vld [vmem:[%s278] sm:$0xff]
    %v280 = vld [vmem:[%s278 + $0x8] sm:$0xff]
    %v281 = vld [vmem:[%s278 + $0x10] sm:$0xff]
    %v282 = vld [vmem:[%s278 + $0x18] sm:$0xff]
    %s283 = scalar_lea.vmem [#allocation7], 1
    %v284 = vld [vmem:[%s283] sm:$0x1]
    %v286 = vsel %vm90, %v273, 0
    %288 = vmatprep.subr.mxu0 0.0
    %289 = vmatpush1.msra.mxu0 %v279
    %290 = vmatprep.subr.mxu0 0.0
    %291 = vmatpush1.msra.mxu0 %v280
    %292 = vmatprep.subr.mxu0 0.0
    %293 = vmatpush1.msra.mxu0 %v281
    %294 = vmatprep.subr.mxu0 0.0
    %295 = vmatpush1.msra.mxu0 %v282
    %296 = vmatprep.subr.mxu0 0.0
    %297 = vmatpush1.msra.mxu0 0.0
    %298 = vmatprep.subr.mxu0 0.0
    %299 = vmatpush1.msra.mxu0 0.0
    %300 = vmatprep.subr.mxu0 0.0
    %301 = vmatpush1.msra.mxu0 0.0
    %302 = vmatprep.subr.mxu0 0.0
    %303 = vmatpush1.msra.mxu0 0.0
    %304 = vmatprep.subr.mxu0 0.0
    %305 = vmatpush1.msra.mxu0 0.0
    %306 = vmatprep.subr.mxu0 0.0
    %307 = vmatpush1.msra.mxu0 0.0
    %308 = vmatprep.subr.mxu0 0.0
    %309 = vmatpush1.msra.mxu0 0.0
    %310 = vmatprep.subr.mxu0 0.0
    %311 = vmatpush1.msra.mxu0 0.0
    %312 = vmatprep.subr.mxu0 0.0
    %313 = vmatpush1.msra.mxu0 0.0
    %314 = vmatprep.subr.mxu0 0.0
    %315 = vmatpush1.msra.mxu0 0.0
    %316 = vmatprep.subr.mxu0 0.0
    %317 = vmatpush1.msra.mxu0 0.0
    %318 = vmatprep.subr.mxu0 0.0
    %319 = vmatpush1.msra.mxu0 0.0
    %320 = vmatprep.subr.mxu0 0.0
    %321 = vmatpush1.msra.mxu0 0.0
    %322 = vmatprep.subr.mxu0 0.0
    %323 = vmatpush1.msra.mxu0 0.0
    %324 = vmatprep.subr.mxu0 0.0
    %325 = vmatpush1.msra.mxu0 0.0
    %326 = vmatprep.subr.mxu0 0.0
    %327 = vmatpush1.msra.mxu0 0.0
    %328 = vmatprep.subr.mxu0 0.0
    %329 = vmatpush1.msra.mxu0 0.0
    %330 = vmatprep.subr.mxu0 0.0
    %331 = vmatpush1.msra.mxu0 0.0
    %332 = vmatprep.subr.mxu0 0.0
    %333 = vmatpush1.msra.mxu0 0.0
    %334 = vmatprep.subr.mxu0 0.0
    %335 = vmatpush1.msra.mxu0 0.0
    %336 = vmatprep.subr.mxu0 0.0
    %337 = vmatpush1.msra.mxu0 0.0
    %338 = vmatprep.subr.mxu0 0.0
    %339 = vmatpush1.msra.mxu0 0.0
    %340 = vmatprep.subr.mxu0 0.0
    %341 = vmatpush1.msra.mxu0 0.0
    %342 = vmatprep.subr.mxu0 0.0
    %343 = vmatpush1.msra.mxu0 0.0
    %344 = vmatprep.subr.mxu0 0.0
    %345 = vmatpush1.msra.mxu0 0.0
    %346 = vmatprep.subr.mxu0 0.0
    %347 = vmatpush1.msra.mxu0 0.0
    %348 = vmatprep.subr.mxu0 0.0
    %349 = vmatpush1.msra.mxu0 0.0
    %350 = vmatprep.subr.mxu0 0.0
    %351 = vmatpush1.msra.mxu0 0.0
    %352 = vmatprep.mubr.f32.mxu0 0.0
    %353 = vmatmul.mubr.f32.gmra.mrb[0].mxu0 %v286
    %v354 = vpop.f32.mrb[0].mxu0
    %v355 = vadd.f32 0.0, %v354
    %v356 = vpop.f32.mrb[0].mxu0
    %357 = vdwg.mxu0
    %v359 = vsel %vm164, %v272, 0
    %361 = vmatprep.subr.mxu0 0.0
    %362 = vmatpush1.msra.mxu0 %v276
    %363 = vmatprep.subr.mxu0 0.0
    %364 = vmatpush1.msra.mxu0 %v277
    %365 = vmatprep.subr.mxu0 0.0
    %366 = vmatpush1.msra.mxu0 0.0
    %367 = vmatprep.subr.mxu0 0.0
    %368 = vmatpush1.msra.mxu0 0.0
    %369 = vmatprep.subr.mxu0 0.0
    %370 = vmatpush1.msra.mxu0 0.0
    %371 = vmatprep.subr.mxu0 0.0
    %372 = vmatpush1.msra.mxu0 0.0
    %373 = vmatprep.subr.mxu0 0.0
    %374 = vmatpush1.msra.mxu0 0.0
    %375 = vmatprep.subr.mxu0 0.0
    %376 = vmatpush1.msra.mxu0 0.0
    %377 = vmatprep.subr.mxu0 0.0
    %378 = vmatpush1.msra.mxu0 0.0
    %379 = vmatprep.subr.mxu0 0.0
    %380 = vmatpush1.msra.mxu0 0.0
    %381 = vmatprep.subr.mxu0 0.0
    %382 = vmatpush1.msra.mxu0 0.0
    %383 = vmatprep.subr.mxu0 0.0
    %384 = vmatpush1.msra.mxu0 0.0
    %385 = vmatprep.subr.mxu0 0.0
    %386 = vmatpush1.msra.mxu0 0.0
    %387 = vmatprep.subr.mxu0 0.0
    %388 = vmatpush1.msra.mxu0 0.0
    %389 = vmatprep.subr.mxu0 0.0
    %390 = vmatpush1.msra.mxu0 0.0
    %391 = vmatprep.subr.mxu0 0.0
    %392 = vmatpush1.msra.mxu0 0.0
    %393 = vmatprep.subr.mxu0 0.0
    %394 = vmatpush1.msra.mxu0 0.0
    %395 = vmatprep.subr.mxu0 0.0
    %396 = vmatpush1.msra.mxu0 0.0
    %397 = vmatprep.subr.mxu0 0.0
    %398 = vmatpush1.msra.mxu0 0.0
    %399 = vmatprep.subr.mxu0 0.0
    %400 = vmatpush1.msra.mxu0 0.0
    %401 = vmatprep.subr.mxu0 0.0
    %402 = vmatpush1.msra.mxu0 0.0
    %403 = vmatprep.subr.mxu0 0.0
    %404 = vmatpush1.msra.mxu0 0.0
    %405 = vmatprep.subr.mxu0 0.0
    %406 = vmatpush1.msra.mxu0 0.0
    %407 = vmatprep.subr.mxu0 0.0
    %408 = vmatpush1.msra.mxu0 0.0
    %409 = vmatprep.subr.mxu0 0.0
    %410 = vmatpush1.msra.mxu0 0.0
    %411 = vmatprep.subr.mxu0 0.0
    %412 = vmatpush1.msra.mxu0 0.0
    %413 = vmatprep.subr.mxu0 0.0
    %414 = vmatpush1.msra.mxu0 0.0
    %415 = vmatprep.subr.mxu0 0.0
    %416 = vmatpush1.msra.mxu0 0.0
    %417 = vmatprep.subr.mxu0 0.0
    %418 = vmatpush1.msra.mxu0 0.0
    %419 = vmatprep.subr.mxu0 0.0
    %420 = vmatpush1.msra.mxu0 0.0
    %421 = vmatprep.subr.mxu0 0.0
    %422 = vmatpush1.msra.mxu0 0.0
    %423 = vmatprep.subr.mxu0 0.0
    %424 = vmatpush1.msra.mxu0 0.0
    %425 = vmatprep.mubr.f32.mxu0 0.0
    %426 = vmatmul.mubr.f32.gmra.mrb[0].mxu0 %v359
    %v427 = vpop.f32.mrb[0].mxu0
    %v428 = vadd.f32 %v355, %v427
    %v429 = vpop.f32.mrb[0].mxu0
    %430 = vdwg.mxu0
    %v432 = vlaneseq
    %v433 = vshrl.u32 %v432, 7
    %v434 = vsub.s32 0, %v433
    %v435 = vrot.slane %v284, %v434
    %v437 = vadd.f32 %v428, %v435
    %v438 = vxor.u32 %v437, 2147483648
    %v439 = vmul.f32 %v438, 1.442695
    %v440 = vpow.pop %v439
    %v441 = vadd.f32 %v440, 1.0
    %v442 = vrcp.pop %v441
    %v443 = vmul.f32 1.0, %v442
    %v444 = vtanh.pop %v437
    %446 = vrot.lane.b32.xlu0 %v274, 32
    %v447 = vpop.permute.xlu0 %446
    %v449 = vmul.f32 %v443, %v447
    %451 = vrot.lane.b32.xlu0 %v444, 32
    %v452 = vpop.permute.xlu0 %451
    %v454 = vmul.f32 %v443, %v452
    %456 = vrot.lane.b32.xlu0 %v454, 32
    %v457 = vpop.permute.xlu0 %456
    %v459 = vadd.f32 %v449, %v457
    %461 = vrot.lane.b32.xlu0 %v459, 32
    %v462 = vpop.permute.xlu0 %461
    %v464 = vmul.f32 %v443, %v462
    %465 = vrot.lane.b32.xlu0 %v266, 96
    %v466 = vpop.permute.xlu0 %465
    %vm468 = vcmask 254976
    %469 = vst.msk [vmem:[#allocation8] sm:$0x3] %vm468, %v466
    %471 = vrot.lane.b32.xlu0 %v271, 64
    %v472 = vpop.permute.xlu0 %471
    %474 = vst.msk [vmem:[#allocation9] sm:$0x3] %vm468, %v472
    %475 = vrot.lane.b32.xlu0 %v459, 96
    %v476 = vpop.permute.xlu0 %475
    %478 = vst.msk [vmem:[#allocation11] sm:$0x3] %vm468, %v476
    %480 = vrot.lane.b32.xlu0 %v464, 64
    %v481 = vpop.permute.xlu0 %480
    %483 = vst.msk [vmem:[#allocation12] sm:$0x3] %vm468, %v481
    // Predicated region
    $region50: #{bilstm_forward.1} parent=1 // pred_check
      _
    $region51: #{bilstm_forward.1} parent=1 // pred_check_branch
      %485 = sbr.rel (0) target = $region53
    $region52: #{bilstm_forward.1} parent=1 // pred_region
      %s487 = ssub.s32 32, 32
      %488 = vsyncadd [#allocation4], %s487
      %s490 = sshll.u32 [#allocation8], 4
      %s491 = int_to_ptr.vmem [resolvable:$true] %s490
      %493 = dma.vmem_to_hbm [thread:$0]  %s491, 32, %s9, [#allocation4]
    $region53: #{bilstm_forward.1} parent=1 // pred_fallthru
      _
    // Predicated region
    $region54: #{bilstm_forward.1} parent=1 // pred_check
      _
    $region55: #{bilstm_forward.1} parent=1 // pred_check_branch
      %495 = sbr.rel (0) target = $region57
    $region56: #{bilstm_forward.1} parent=1 // pred_region
      %s497 = ssub.s32 32, 32
      %498 = vsyncadd [#allocation10], %s497
      %s500 = sshll.u32 [#allocation9], 4
      %s501 = int_to_ptr.vmem [resolvable:$true] %s500
      %503 = dma.vmem_to_hbm [thread:$0]  %s501, 32, %s10, [#allocation10]
    $region57: #{bilstm_forward.1} parent=1 // pred_fallthru
      _
    // Predicated region
    $region58: #{bilstm_forward.1} parent=1 // pred_check
      _
    $region59: #{bilstm_forward.1} parent=1 // pred_check_branch
      %505 = sbr.rel (0) target = $region61
    $region60: #{bilstm_forward.1} parent=1 // pred_region
      %s507 = ssub.s32 32, 32
      %508 = vsyncadd [#allocation10], %s507
      %s510 = sshll.u32 [#allocation11], 4
      %s511 = int_to_ptr.vmem [resolvable:$true] %s510
      %513 = dma.vmem_to_hbm [thread:$0]  %s511, 32, %s11, [#allocation10]
    $region61: #{bilstm_forward.1} parent=1 // pred_fallthru
      _
    // Predicated region
    $region62: #{bilstm_forward.1} parent=1 // pred_check
      _
    $region63: #{bilstm_forward.1} parent=1 // pred_check_branch
      %515 = sbr.rel (0) target = $region65
    $region64: #{bilstm_forward.1} parent=1 // pred_region
      %s517 = ssub.s32 32, 32
      %518 = vsyncadd [#allocation13], %s517
      %s520 = sshll.u32 [#allocation12], 4
      %s521 = int_to_ptr.vmem [resolvable:$true] %s520
      %523 = dma.vmem_to_hbm [thread:$0]  %s521, 32, %s12, [#allocation13]
    $region65: #{bilstm_forward.1} parent=1 // pred_fallthru
      _
    // Predicated region
    $region66: #{bilstm_forward.1} parent=1 // pred_check
      _
    $region67: #{bilstm_forward.1} parent=1 // pred_check_branch
      %525 = sbr.rel (0) target = $region69
    $region68: #{bilstm_forward.1} parent=1 // pred_region
      %526 = dma.done [#allocation4], 32
    $region69: #{bilstm_forward.1} parent=1 // pred_fallthru
      _
    // Predicated region
    $region70: #{bilstm_forward.1} parent=1 // pred_check
      _
    $region71: #{bilstm_forward.1} parent=1 // pred_check_branch
      %528 = sbr.rel (0) target = $region73
    $region72: #{bilstm_forward.1} parent=1 // pred_region
      %529 = dma.done [#allocation10], 32
    $region73: #{bilstm_forward.1} parent=1 // pred_fallthru
      _
    // Predicated region
    $region74: #{bilstm_forward.1} parent=1 // pred_check
      _
    $region75: #{bilstm_forward.1} parent=1 // pred_check_branch
      %531 = sbr.rel (0) target = $region77
    $region76: #{bilstm_forward.1} parent=1 // pred_region
      %532 = dma.done [#allocation10], 32
    $region77: #{bilstm_forward.1} parent=1 // pred_fallthru
      _
    // Predicated region
    $region78: #{bilstm_forward.1} parent=1 // pred_check
      _
    $region79: #{bilstm_forward.1} parent=1 // pred_check_branch
      %534 = sbr.rel (0) target = $region81
    $region80: #{bilstm_forward.1} parent=1 // pred_region
      %535 = dma.done [#allocation13], 32
    $region81: #{bilstm_forward.1} parent=1 // pred_fallthru
      _
    %536 = vsyncpa [#allocation3], 1
    %537 = vsyncpa [#allocation6], 1
    %538 = vsyncpa [#allocation4], 1
    %539 = vsyncpa [#allocation10], 1
    %540 = vsyncpa [#allocation13], 1

</llo_original>
